<compile_context>
chip_gen: v7x
topology: tpu7x:2x2x1
jax: 0.10.0
libtpu: 0.0.40
codegen_flags: <defaults>
</compile_context>

<pallas_src>
import jax
import jax.numpy as jnp
from jax.experimental import pallas as pl
from jax.experimental.pallas import tpu as pltpu

_LANE = 128
_SUBLANE = 8  # x / out tiles stay f32 -> 8-row sublane alignment for TB


def _round_up(v, m):
    return ((v + m - 1) // m) * m


def _cls_head_kernel(x_ref, w1_ref, b1_ref, w2_ref, b2_ref, o_ref):
    # x_ref:  (TB, H) f32 | w1_ref: (H, H)    | b1_ref: (1, H)  f32
    # w2_ref: (H, Lp)     | b2_ref: (1, Lp) f32 | o_ref: (TB, Lp) f32
    # dropout is identity at inference time
    x = x_ref[...].astype(w1_ref.dtype)          # cast MXU operand in-kernel
    h = jnp.dot(x, w1_ref[...], preferred_element_type=jnp.float32)
    h = jnp.tanh(h + b1_ref[...])                # f32 bias + tanh (VPU/EUP)
    # second dropout: identity at inference
    y = jnp.dot(h.astype(w2_ref.dtype), w2_ref[...],
                preferred_element_type=jnp.float32)
    o_ref[...] = (y + b2_ref[...]).astype(o_ref.dtype)


def prepare_cls_head_params(w_dense, b_dense, w_out, b_out,
                            *, mxu_dtype=jnp.bfloat16):
    """One-time weight preparation. Call OUTSIDE the hot path and reuse.

    w_dense: [H, H] ([in, out]); b_dense: [H]; w_out: [H, L] ([in, out]);
    b_out: [L].  Weights are cast to `mxu_dtype` (None keeps f32); out_proj is
    zero-padded to a lane-dense multiple of 128 columns; biases stay f32.
    """
    H = w_dense.shape[0]
    L = w_out.shape[1]
    Lp = _round_up(L, _LANE)

    wd = w_dense if mxu_dtype is None else w_dense.astype(mxu_dtype)
    wo = w_out if mxu_dtype is None else w_out.astype(mxu_dtype)
    w_out_p = jnp.zeros((H, Lp), wo.dtype).at[:, :L].set(wo)
    b_out_p = jnp.zeros((1, Lp), jnp.float32).at[0, :L].set(
        b_out.astype(jnp.float32))
    b_dense2 = b_dense.astype(jnp.float32).reshape(1, H)

    return dict(w_dense=wd, b_dense=b_dense2, w_out=w_out_p, b_out=b_out_p,
                num_labels=L)


def roberta_classification_head_apply(x, params, *, block_batch=256):
    """x: [B, H] -> logits [B, L] (f32). `params` from prepare_cls_head_params."""
    B, H = x.shape
    w1, b1 = params["w_dense"], params["b_dense"]
    w2, b2 = params["w_out"], params["b_out"]
    L = params["num_labels"]
    Lp = w2.shape[1]

    # Batch tile: sublane-aligned regardless of the user-supplied block_batch,
    # and capped at ~B/2 so realistic B gives >= 2 grid steps (v7x megacore
    # shards the "parallel" axis across both TensorCores).
    tb_cap = max(_SUBLANE, _round_up(min(block_batch, B), _SUBLANE))
    tb_half = max(_SUBLANE, _round_up(pl.cdiv(B, 2), _SUBLANE))
    TB = min(tb_cap, tb_half)
    grid = (pl.cdiv(B, TB),)  # ragged last block handled by Pallas; no x pad

    # Explicit VMEM budget: resident weights + biases (budget 2x for the
    # default double buffering even though their block index never changes)
    # plus double-buffered x/out tiles, with slack.
    itemsz = lambda a: a.dtype.itemsize
    wbytes = (w1.size * itemsz(w1) + w2.size * itemsz(w2)
              + b1.size * itemsz(b1) + b2.size * itemsz(b2))
    tbytes = TB * (H + Lp) * 4
    vmem_limit = int(2.5 * (wbytes + tbytes))          # 2x buffers + 25% slack
    vmem_limit = min(max(vmem_limit, 32 << 20), 64 << 20)

    cost = pl.CostEstimate(
        flops=2 * B * H * (H + Lp),
        transcendentals=B * H,  # tanh
        bytes_accessed=x.size * itemsz(x) + wbytes + B * Lp * 4,
    )

    out = pl.pallas_call(
        _cls_head_kernel,
        out_shape=jax.ShapeDtypeStruct((B, Lp), jnp.float32),
        grid=grid,
        in_specs=[
            pl.BlockSpec((TB, H), lambda i: (i, 0)),   # x: streamed per tile
            pl.BlockSpec((H, H), lambda i: (0, 0)),    # W1: VMEM-resident
            pl.BlockSpec((1, H), lambda i: (0, 0)),    # b1
            pl.BlockSpec((H, Lp), lambda i: (0, 0)),   # W2 (lane-padded)
            pl.BlockSpec((1, Lp), lambda i: (0, 0)),   # b2 (lane-padded)
        ],
        out_specs=pl.BlockSpec((TB, Lp), lambda i: (i, 0)),
        compiler_params=pltpu.CompilerParams(
            dimension_semantics=("parallel",),
            vmem_limit_bytes=vmem_limit),
        cost_estimate=cost,
    )(x, w1, b1, w2, b2)

    return out[:, :L]


def roberta_classification_head(x, w_dense, b_dense, w_out, b_out,
                                *, mxu_dtype=jnp.bfloat16, block_batch=256):
    """Convenience wrapper: prepares params then applies (prefer preparing
    params once with prepare_cls_head_params and reusing them)."""
    params = prepare_cls_head_params(w_dense, b_dense, w_out, b_out,
                                     mxu_dtype=mxu_dtype)
    return roberta_classification_head_apply(x, params,
                                             block_batch=block_batch)


if __name__ == "__main__":
    hidden_size = 32
    num_labels = 4
    batch = 8
    dropout = 0.1  # identity at inference; kept for interface parity
    # TODO(synk): training-mode dropout (stochastic masking) not implemented;
    # forward here matches model.eval() semantics.

    key = jax.random.PRNGKey(0)
    k_x, k_w1, k_b1, k_w2, k_b2, k_x2 = jax.random.split(key, 6)

    x = jax.random.normal(k_x, (batch, hidden_size), dtype=jnp.float32)
    # PyTorch shapes: dense [H,H], out_proj [L,H]; stored transposed ([in,out]).
    w_dense = jax.random.normal(k_w1, (hidden_size, hidden_size),
                                dtype=jnp.float32) * 0.05
    b_dense = jax.random.normal(k_b1, (hidden_size,), dtype=jnp.float32) * 0.05
    w_out = jax.random.normal(k_w2, (hidden_size, num_labels),
                              dtype=jnp.float32) * 0.05
    b_out = jax.random.normal(k_b2, (num_labels,), dtype=jnp.float32) * 0.05

    ref = jnp.tanh(x @ w_dense + b_dense) @ w_out + b_out

    # --- f32 MXU path, tight tolerance ---------------------------------------
    out_f32 = roberta_classification_head(x, w_dense, b_dense, w_out, b_out,
                                          mxu_dtype=None)
    out_f32 = jax.block_until_ready(out_f32)
    assert out_f32.shape == (batch, num_labels)
    assert jnp.allclose(out_f32, ref, atol=1e-5, rtol=1e-5)

    # --- default perf path: bf16 MXU operands, f32 accumulation --------------
    # Weights prepared once and reused across calls (no per-call cast/pad).
    params = prepare_cls_head_params(w_dense, b_dense, w_out, b_out)
    out_bf16 = roberta_classification_head_apply(x, params)
    out_bf16 = jax.block_until_ready(out_bf16)
    assert out_bf16.dtype == jnp.float32
    assert jnp.allclose(out_bf16, ref, atol=2e-2, rtol=2e-2)

    # --- non-divisible batch: ragged last block, >= 2 grid steps -------------
    big_batch = 200
    x_big = jax.random.normal(k_x2, (big_batch, hidden_size), dtype=jnp.float32)
    ref_big = jnp.tanh(x_big @ w_dense + b_dense) @ w_out + b_out
    out_big = roberta_classification_head_apply(x_big, params, block_batch=64)
    out_big = jax.block_until_ready(out_big)
    assert out_big.shape == (big_batch, num_labels)
    assert jnp.allclose(out_big, ref_big, atol=2e-2, rtol=2e-2)

    print("KERNEL_OK")
</pallas_src>

<mosaic_0001>
module attributes {stable_mosaic.version = 11 : i64} {
  func.func @_cls_head_kernel(%arg0: i32, %arg1: memref<8x32xf32, #tpu.memory_space<vmem>>, %arg2: memref<32x32xf32, #tpu.memory_space<vmem>>, %arg3: memref<1x32xf32, #tpu.memory_space<vmem>>, %arg4: memref<32x128xf32, #tpu.memory_space<vmem>>, %arg5: memref<1x128xf32, #tpu.memory_space<vmem>>, %arg6: memref<8x128xf32, #tpu.memory_space<vmem>>) attributes {dimension_semantics = [#tpu.dimension_semantics<parallel>], iteration_bounds = array<i64: 1>, scalar_prefetch = 0 : i64, scratch_operands = 0 : i64, tpu.core_type = #tpu.core_type<tc>, window_params = [{transform_indices = @transform_0, window_bounds = array<i64: 8, 32>}, {pipeline_mode = #tpu.pipeline_mode<synchronous>, transform_indices = @transform_1, window_bounds = array<i64: 32, 32>}, {pipeline_mode = #tpu.pipeline_mode<synchronous>, transform_indices = @transform_2, window_bounds = array<i64: 1, 32>}, {pipeline_mode = #tpu.pipeline_mode<synchronous>, transform_indices = @transform_3, window_bounds = array<i64: 32, 128>}, {pipeline_mode = #tpu.pipeline_mode<synchronous>, transform_indices = @transform_4, window_bounds = array<i64: 1, 128>}, {transform_indices = @transform_5, window_bounds = array<i64: 8, 128>}]} {
    %c0 = arith.constant 0 : index
    %c0_0 = arith.constant 0 : index
    %0 = vector.load %arg1[%c0, %c0_0] : memref<8x32xf32, #tpu.memory_space<vmem>>, vector<8x32xf32>
    %c0_1 = arith.constant 0 : index
    %c0_2 = arith.constant 0 : index
    %1 = vector.load %arg2[%c0_1, %c0_2] : memref<32x32xf32, #tpu.memory_space<vmem>>, vector<32x32xf32>
    %cst = arith.constant dense<0.000000e+00> : vector<8x32xf32>
    %2 = tpu.matmul %0, %1, %cst {dimension_numbers = #tpu.dot_dimension_numbers<[1], [0], [0], [1], [0, 0, 1, 1], [], []>} : vector<8x32xf32>, vector<32x32xf32>, vector<8x32xf32> -> vector<8x32xf32>
    %c0_3 = arith.constant 0 : index
    %c0_4 = arith.constant 0 : index
    %3 = vector.load %arg3[%c0_3, %c0_4] : memref<1x32xf32, #tpu.memory_space<vmem>>, vector<1x32xf32>
    %4 = vector.broadcast %3 : vector<1x32xf32> to vector<8x32xf32>
    %5 = arith.addf %2, %4 : vector<8x32xf32>
    %6 = math.tanh %5 : vector<8x32xf32>
    %c0_5 = arith.constant 0 : index
    %c0_6 = arith.constant 0 : index
    %7 = vector.load %arg4[%c0_5, %c0_6] : memref<32x128xf32, #tpu.memory_space<vmem>>, vector<32x128xf32>
    %cst_7 = arith.constant dense<0.000000e+00> : vector<8x128xf32>
    %8 = tpu.matmul %6, %7, %cst_7 {dimension_numbers = #tpu.dot_dimension_numbers<[1], [0], [0], [1], [0, 0, 1, 1], [], []>} : vector<8x32xf32>, vector<32x128xf32>, vector<8x128xf32> -> vector<8x128xf32>
    %c0_8 = arith.constant 0 : index
    %c0_9 = arith.constant 0 : index
    %9 = vector.load %arg5[%c0_8, %c0_9] : memref<1x128xf32, #tpu.memory_space<vmem>>, vector<1x128xf32>
    %10 = vector.broadcast %9 : vector<1x128xf32> to vector<8x128xf32>
    %11 = arith.addf %8, %10 : vector<8x128xf32>
    %c0_10 = arith.constant 0 : index
    %c0_11 = arith.constant 0 : index
    %12 = vector.load %arg6[%c0_10, %c0_11] : memref<8x128xf32, #tpu.memory_space<vmem>>, vector<8x128xf32>
    tpu.vector_store %arg6[%c0_10, %c0_11], %11 {strides = array<i32>} : memref<8x128xf32, #tpu.memory_space<vmem>>, vector<8x128xf32>,
    return
  }
  func.func @transform_0(%arg0: i32) -> (i32, i32) {
    %c0_i32 = arith.constant 0 : i32
    %c0_i32_0 = arith.constant 0 : i32
    return %arg0, %c0_i32 : i32, i32
  }
  func.func @transform_1(%arg0: i32) -> (i32, i32) {
    %c0_i32 = arith.constant 0 : i32
    %c0_i32_0 = arith.constant 0 : i32
    %c0_i32_1 = arith.constant 0 : i32
    return %c0_i32, %c0_i32_0 : i32, i32
  }
  func.func @transform_2(%arg0: i32) -> (i32, i32) {
    %c0_i32 = arith.constant 0 : i32
    %c0_i32_0 = arith.constant 0 : i32
    %c0_i32_1 = arith.constant 0 : i32
    return %c0_i32, %c0_i32_0 : i32, i32
  }
  func.func @transform_3(%arg0: i32) -> (i32, i32) {
    %c0_i32 = arith.constant 0 : i32
    %c0_i32_0 = arith.constant 0 : i32
    %c0_i32_1 = arith.constant 0 : i32
    return %c0_i32, %c0_i32_0 : i32, i32
  }
  func.func @transform_4(%arg0: i32) -> (i32, i32) {
    %c0_i32 = arith.constant 0 : i32
    %c0_i32_0 = arith.constant 0 : i32
    %c0_i32_1 = arith.constant 0 : i32
    return %c0_i32, %c0_i32_0 : i32, i32
  }
  func.func @transform_5(%arg0: i32) -> (i32, i32) {
    %c0_i32 = arith.constant 0 : i32
    %c0_i32_0 = arith.constant 0 : i32
    return %arg0, %c0_i32 : i32, i32
  }
}

</mosaic_0001>

<llo_original>
// kernel: tpu_custom_call.1
$region0: #{tpu_custom_call.1}
  #allocation0 [shape = 'u32[]', space=smem, size = 0x4, offset = 0x4, fixed_abs, tag = 'smem constant byte address 0x4 - core index']
  #allocation1 [shape = 'u32[144,128]{1,0:T(1,128)}', space=vmem, size = 0x12000, scoped, tag = 'internal scratch']
  %s0 = inlined_call_operand.hbm [shape: f32[8,32], index: 0, kind: input, shape index: {}]
  %s1 = inlined_call_operand.hbm [shape: f32[32,32], index: 1, kind: input, shape index: {}]
  %s2 = inlined_call_operand.vmem [shape: f32[1,32], index: 2, kind: input, shape index: {}]
  %s3 = inlined_call_operand.hbm [shape: f32[32,128], index: 3, kind: input, shape index: {}]
  %s4 = inlined_call_operand.vmem [shape: f32[1,128], index: 4, kind: input, shape index: {}]
  %s5 = inlined_call_operand.hbm [shape: f32[8,128], index: 5, kind: output, shape index: {}]
  %s6 = sld [smem:[#allocation0]]
  $region42: #{tpu_custom_call.1} parent=0
    _
  %s8 = ssub.s32 1, %s6
  %s9 = scalar_select 0, %s8, %s6
  $region1: #{tpu_custom_call.1} parent=0
    #allocation2 [shape = 'u8[4096]{0}', space=vmem, size = 0x1000, scoped, tag = 'input window, operand 0, single buffered']
    #allocation3 [shape = 's32[1]{0}', space=sflag, size = 0x4, scoped, tag = 'scoped memory for tpu_custom_call.1']
    #allocation4 [shape = 's32[1]{0}', space=sflag, size = 0x4, scoped, tag = 'scoped memory for tpu_custom_call.1']
    #allocation5 [shape = 'u8[16384]{0}', space=vmem, size = 0x4000, scoped, tag = 'input window, operand 1, single buffered']
    #allocation6 [shape = 's32[1]{0}', space=sflag, size = 0x4, scoped, tag = 'scoped memory for tpu_custom_call.1']
    #allocation7 [shape = 'u8[16384]{0}', space=vmem, size = 0x4000, scoped, tag = 'input window, operand 3, single buffered']
    #allocation8 [shape = 'u8[4096]{0}', space=vmem, size = 0x1000, scoped, tag = 'output window, operand 0, single buffered']
    %10 = vsyncpa [#allocation3], 0
    %11 = vsyncpa [#allocation6], 0
    %12 = vsyncpa [#allocation4], 0
    // Predicated region
    $region2: #{tpu_custom_call.1} parent=1 // pred_check
      _
    $region3: #{tpu_custom_call.1} parent=1 // pred_check_branch
      %14 = sbr.rel (0) target = $region5
    $region4: #{tpu_custom_call.1} parent=1 // pred_region
      %s16 = ssub.s32 128, 128
      %17 = vsyncadd [#allocation3], %s16
      %s19 = sshll.u32 [#allocation2], 4
      %s20 = int_to_ptr.vmem [resolvable:$true] %s19
      %22 = dma.hbm_to_vmem [thread:$0]  %s0, 128, %s20, [#allocation3]
    $region5: #{tpu_custom_call.1} parent=1 // pred_fallthru
      _
    // Predicated region
    $region6: #{tpu_custom_call.1} parent=1 // pred_check
      _
    $region7: #{tpu_custom_call.1} parent=1 // pred_check_branch
      %24 = sbr.rel (0) target = $region9
    $region8: #{tpu_custom_call.1} parent=1 // pred_region
      %s26 = ssub.s32 512, 512
      %27 = vsyncadd [#allocation6], %s26
      %s28 = sshll.u32 [#allocation5], 4
      %s29 = int_to_ptr.vmem [resolvable:$true] %s28
      %34 = dma.hbm_to_vmem [thread:$0]  %s1, 512, %s29, [#allocation6], 128, 128, 8
    $region9: #{tpu_custom_call.1} parent=1 // pred_fallthru
      _
    // Predicated region
    $region10: #{tpu_custom_call.1} parent=1 // pred_check
      _
    $region11: #{tpu_custom_call.1} parent=1 // pred_check_branch
      %36 = sbr.rel (0) target = $region13
    $region12: #{tpu_custom_call.1} parent=1 // pred_region
      _
    $region13: #{tpu_custom_call.1} parent=1 // pred_fallthru
      _
    // Predicated region
    $region14: #{tpu_custom_call.1} parent=1 // pred_check
      _
    $region15: #{tpu_custom_call.1} parent=1 // pred_check_branch
      %38 = sbr.rel (0) target = $region17
    $region16: #{tpu_custom_call.1} parent=1 // pred_region
      %s40 = ssub.s32 512, 512
      %41 = vsyncadd [#allocation6], %s40
      %s42 = sshll.u32 [#allocation7], 4
      %s43 = int_to_ptr.vmem [resolvable:$true] %s42
      %48 = dma.hbm_to_vmem [thread:$0]  %s3, 512, %s43, [#allocation6], 128, 128, 8
    $region17: #{tpu_custom_call.1} parent=1 // pred_fallthru
      _
    // Predicated region
    $region18: #{tpu_custom_call.1} parent=1 // pred_check
      _
    $region19: #{tpu_custom_call.1} parent=1 // pred_check_branch
      %50 = sbr.rel (0) target = $region21
    $region20: #{tpu_custom_call.1} parent=1 // pred_region
      _
    $region21: #{tpu_custom_call.1} parent=1 // pred_fallthru
      _
    // Predicated region
    $region22: #{tpu_custom_call.1} parent=1 // pred_check
      _
    $region23: #{tpu_custom_call.1} parent=1 // pred_check_branch
      %52 = sbr.rel (0) target = $region25
    $region24: #{tpu_custom_call.1} parent=1 // pred_region
      %53 = dma.done [#allocation3], 128
    $region25: #{tpu_custom_call.1} parent=1 // pred_fallthru
      _
    // Predicated region
    $region26: #{tpu_custom_call.1} parent=1 // pred_check
      _
    $region27: #{tpu_custom_call.1} parent=1 // pred_check_branch
      %55 = sbr.rel (0) target = $region29
    $region28: #{tpu_custom_call.1} parent=1 // pred_region
      %56 = dma.done [#allocation6], 512
    $region29: #{tpu_custom_call.1} parent=1 // pred_fallthru
      _
    // Predicated region
    $region30: #{tpu_custom_call.1} parent=1 // pred_check
      _
    $region31: #{tpu_custom_call.1} parent=1 // pred_check_branch
      %58 = sbr.rel (0) target = $region33
    $region32: #{tpu_custom_call.1} parent=1 // pred_region
      %59 = dma.done [#allocation6], 512
    $region33: #{tpu_custom_call.1} parent=1 // pred_fallthru
      _
    %v60 = vld [vmem:[#allocation2] sm:$0xff]
    %v61 = vld [vmem:[#allocation5] sm:$0xff]
    %v62 = vld [vmem:[#allocation5 + $0x8] sm:$0xff]
    %v63 = vld [vmem:[#allocation5 + $0x10] sm:$0xff]
    %v64 = vld [vmem:[#allocation5 + $0x18] sm:$0xff]
    %v65 = vld [vmem:[%s2] sm:$0x1]
    %v67 = vlaneseq
    %v68 = vshrl.u32 %v67, 7
    %v69 = vsub.s32 0, %v68
    %v70 = vrot.slane %v65, %v69
    %vm72 = vcmask 261120
    %v74 = vsel %vm72, %v60, 0
    %76 = vmatprep.subr.mxu0 0.0
    %77 = vmatpush1.msra.mxu0 %v61
    %78 = vmatprep.subr.mxu0 0.0
    %79 = vmatpush1.msra.mxu0 %v62
    %80 = vmatprep.subr.mxu0 0.0
    %81 = vmatpush1.msra.mxu0 %v63
    %82 = vmatprep.subr.mxu0 0.0
    %83 = vmatpush1.msra.mxu0 %v64
    %84 = vmatprep.subr.mxu0 0.0
    %85 = vmatpush1.msra.mxu0 0.0
    %86 = vmatprep.subr.mxu0 0.0
    %87 = vmatpush1.msra.mxu0 0.0
    %88 = vmatprep.subr.mxu0 0.0
    %89 = vmatpush1.msra.mxu0 0.0
    %90 = vmatprep.subr.mxu0 0.0
    %91 = vmatpush1.msra.mxu0 0.0
    %92 = vmatprep.subr.mxu0 0.0
    %93 = vmatpush1.msra.mxu0 0.0
    %94 = vmatprep.subr.mxu0 0.0
    %95 = vmatpush1.msra.mxu0 0.0
    %96 = vmatprep.subr.mxu0 0.0
    %97 = vmatpush1.msra.mxu0 0.0
    %98 = vmatprep.subr.mxu0 0.0
    %99 = vmatpush1.msra.mxu0 0.0
    %100 = vmatprep.subr.mxu0 0.0
    %101 = vmatpush1.msra.mxu0 0.0
    %102 = vmatprep.subr.mxu0 0.0
    %103 = vmatpush1.msra.mxu0 0.0
    %104 = vmatprep.subr.mxu0 0.0
    %105 = vmatpush1.msra.mxu0 0.0
    %106 = vmatprep.subr.mxu0 0.0
    %107 = vmatpush1.msra.mxu0 0.0
    %108 = vmatprep.subr.mxu0 0.0
    %109 = vmatpush1.msra.mxu0 0.0
    %110 = vmatprep.subr.mxu0 0.0
    %111 = vmatpush1.msra.mxu0 0.0
    %112 = vmatprep.subr.mxu0 0.0
    %113 = vmatpush1.msra.mxu0 0.0
    %114 = vmatprep.subr.mxu0 0.0
    %115 = vmatpush1.msra.mxu0 0.0
    %116 = vmatprep.subr.mxu0 0.0
    %117 = vmatpush1.msra.mxu0 0.0
    %118 = vmatprep.subr.mxu0 0.0
    %119 = vmatpush1.msra.mxu0 0.0
    %120 = vmatprep.subr.mxu0 0.0
    %121 = vmatpush1.msra.mxu0 0.0
    %122 = vmatprep.subr.mxu0 0.0
    %123 = vmatpush1.msra.mxu0 0.0
    %124 = vmatprep.subr.mxu0 0.0
    %125 = vmatpush1.msra.mxu0 0.0
    %126 = vmatprep.subr.mxu0 0.0
    %127 = vmatpush1.msra.mxu0 0.0
    %128 = vmatprep.subr.mxu0 0.0
    %129 = vmatpush1.msra.mxu0 0.0
    %130 = vmatprep.subr.mxu0 0.0
    %131 = vmatpush1.msra.mxu0 0.0
    %132 = vmatprep.subr.mxu0 0.0
    %133 = vmatpush1.msra.mxu0 0.0
    %134 = vmatprep.subr.mxu0 0.0
    %135 = vmatpush1.msra.mxu0 0.0
    %136 = vmatprep.subr.mxu0 0.0
    %137 = vmatpush1.msra.mxu0 0.0
    %138 = vmatprep.subr.mxu0 0.0
    %139 = vmatpush1.msra.mxu0 0.0
    %140 = vmatprep.mubr.f32.mxu0 0.0
    %141 = vmatmul.mubr.f32.gmra.mrb[0].mxu0 %v74
    %v142 = vpop.f32.mrb[0].mxu0
    %v143 = vadd.f32 %v70, %v142
    %v144 = vpop.f32.mrb[0].mxu0
    %145 = vdwg.mxu0
    %v146 = vtanh.pop %v143
    %v147 = vld [vmem:[#allocation7] sm:$0xff]
    %v148 = vld [vmem:[#allocation7 + $0x8] sm:$0xff]
    %v149 = vld [vmem:[#allocation7 + $0x10] sm:$0xff]
    %v150 = vld [vmem:[#allocation7 + $0x18] sm:$0xff]
    %v151 = vld [vmem:[%s4] sm:$0x1]
    %v153 = vlaneseq
    %v154 = vshrl.u32 %v153, 7
    %v155 = vsub.s32 0, %v154
    %v156 = vrot.slane %v151, %v155
    %v159 = vsel %vm72, %v146, 0
    %161 = vmatprep.subr.mxu0 0.0
    %162 = vmatpush1.msra.mxu0 %v147
    %163 = vmatprep.subr.mxu0 0.0
    %164 = vmatpush1.msra.mxu0 %v148
    %165 = vmatprep.subr.mxu0 0.0
    %166 = vmatpush1.msra.mxu0 %v149
    %167 = vmatprep.subr.mxu0 0.0
    %168 = vmatpush1.msra.mxu0 %v150
    %169 = vmatprep.subr.mxu0 0.0
    %170 = vmatpush1.msra.mxu0 0.0
    %171 = vmatprep.subr.mxu0 0.0
    %172 = vmatpush1.msra.mxu0 0.0
    %173 = vmatprep.subr.mxu0 0.0
    %174 = vmatpush1.msra.mxu0 0.0
    %175 = vmatprep.subr.mxu0 0.0
    %176 = vmatpush1.msra.mxu0 0.0
    %177 = vmatprep.subr.mxu0 0.0
    %178 = vmatpush1.msra.mxu0 0.0
    %179 = vmatprep.subr.mxu0 0.0
    %180 = vmatpush1.msra.mxu0 0.0
    %181 = vmatprep.subr.mxu0 0.0
    %182 = vmatpush1.msra.mxu0 0.0
    %183 = vmatprep.subr.mxu0 0.0
    %184 = vmatpush1.msra.mxu0 0.0
    %185 = vmatprep.subr.mxu0 0.0
    %186 = vmatpush1.msra.mxu0 0.0
    %187 = vmatprep.subr.mxu0 0.0
    %188 = vmatpush1.msra.mxu0 0.0
    %189 = vmatprep.subr.mxu0 0.0
    %190 = vmatpush1.msra.mxu0 0.0
    %191 = vmatprep.subr.mxu0 0.0
    %192 = vmatpush1.msra.mxu0 0.0
    %193 = vmatprep.subr.mxu0 0.0
    %194 = vmatpush1.msra.mxu0 0.0
    %195 = vmatprep.subr.mxu0 0.0
    %196 = vmatpush1.msra.mxu0 0.0
    %197 = vmatprep.subr.mxu0 0.0
    %198 = vmatpush1.msra.mxu0 0.0
    %199 = vmatprep.subr.mxu0 0.0
    %200 = vmatpush1.msra.mxu0 0.0
    %201 = vmatprep.subr.mxu0 0.0
    %202 = vmatpush1.msra.mxu0 0.0
    %203 = vmatprep.subr.mxu0 0.0
    %204 = vmatpush1.msra.mxu0 0.0
    %205 = vmatprep.subr.mxu0 0.0
    %206 = vmatpush1.msra.mxu0 0.0
    %207 = vmatprep.subr.mxu0 0.0
    %208 = vmatpush1.msra.mxu0 0.0
    %209 = vmatprep.subr.mxu0 0.0
    %210 = vmatpush1.msra.mxu0 0.0
    %211 = vmatprep.subr.mxu0 0.0
    %212 = vmatpush1.msra.mxu0 0.0
    %213 = vmatprep.subr.mxu0 0.0
    %214 = vmatpush1.msra.mxu0 0.0
    %215 = vmatprep.subr.mxu0 0.0
    %216 = vmatpush1.msra.mxu0 0.0
    %217 = vmatprep.subr.mxu0 0.0
    %218 = vmatpush1.msra.mxu0 0.0
    %219 = vmatprep.subr.mxu0 0.0
    %220 = vmatpush1.msra.mxu0 0.0
    %221 = vmatprep.subr.mxu0 0.0
    %222 = vmatpush1.msra.mxu0 0.0
    %223 = vmatprep.subr.mxu0 0.0
    %224 = vmatpush1.msra.mxu0 0.0
    %225 = vmatprep.mubr.f32.mxu0 0.0
    %226 = vmatmul.mubr.f32.gmra.mrb[0].mxu0 %v159
    %v227 = vpop.f32.mrb[0].mxu0
    %v228 = vadd.f32 %v156, %v227
    %v229 = vpop.f32.mrb[0].mxu0
    %230 = vdwg.mxu0
    %231 = vst [vmem:[#allocation8] sm:$0xff] %v228
    // Predicated region
    $region34: #{tpu_custom_call.1} parent=1 // pred_check
      _
    $region35: #{tpu_custom_call.1} parent=1 // pred_check_branch
      %233 = sbr.rel (0) target = $region37
    $region36: #{tpu_custom_call.1} parent=1 // pred_region
      %s235 = ssub.s32 128, 128
      %236 = vsyncadd [#allocation4], %s235
      %s238 = sshll.u32 [#allocation8], 4
      %s239 = int_to_ptr.vmem [resolvable:$true] %s238
      %241 = dma.vmem_to_hbm [thread:$0]  %s239, 128, %s5, [#allocation4]
    $region37: #{tpu_custom_call.1} parent=1 // pred_fallthru
      _
    // Predicated region
    $region38: #{tpu_custom_call.1} parent=1 // pred_check
      _
    $region39: #{tpu_custom_call.1} parent=1 // pred_check_branch
      %243 = sbr.rel (0) target = $region41
    $region40: #{tpu_custom_call.1} parent=1 // pred_region
      %244 = dma.done [#allocation4], 128
    $region41: #{tpu_custom_call.1} parent=1 // pred_fallthru
      _
    %245 = vsyncpa [#allocation3], 1
    %246 = vsyncpa [#allocation6], 1
    %247 = vsyncpa [#allocation4], 1

</llo_original>
